<compile_context>
chip_gen: v7x
topology: tpu7x:2x2x1
jax: 0.10.0
libtpu: 0.0.40
codegen_flags: <defaults>
</compile_context>

<pallas_src>
import functools

import jax
import jax.numpy as jnp
import numpy as np
from jax import lax
from jax.experimental import pallas as pl
from jax.experimental.pallas import tpu as pltpu


def _round_up(x, m):
    return (x + m - 1) // m * m


# ------------------------------ kernel ------------------------------------- #

def _base_linear_kernel(*refs, skip_kind, n_valid, slope, eps):
    """Fused Linear + LayerNorm + skip + LeakyReLU.

    Grid = (m_tiles, k_tiles); k is the reduction axis (innermost, "arbitrary").
    Refs (depending on skip_kind):
      none:     x, w, b, gamma, beta,             out, acc
      identity: x, w, b, gamma, beta, res,        out, acc
      proj:     x, w, b, gamma, beta, ws, bs,     out, acc, skip_acc
    Shapes: x (tm, tk) bf16; w/ws (tk, Np) bf16; row params (1, Np) f32;
            out (tm, Np) f32; acc/skip_acc (tm, Np) f32 scratch.
    """
    if skip_kind == "proj":
        (x_ref, w_ref, b_ref, g_ref, beta_ref, ws_ref, bs_ref,
         o_ref, acc_ref, sk_ref) = refs
    elif skip_kind == "identity":
        (x_ref, w_ref, b_ref, g_ref, beta_ref, res_ref,
         o_ref, acc_ref) = refs
    else:
        x_ref, w_ref, b_ref, g_ref, beta_ref, o_ref, acc_ref = refs

    k = pl.program_id(1)
    nk = pl.num_programs(1)

    @pl.when(k == 0)
    def _init():
        acc_ref[...] = jnp.zeros_like(acc_ref)
        if skip_kind == "proj":
            sk_ref[...] = jnp.zeros_like(sk_ref)

    xt = x_ref[...]                                        # (tm, tk) bf16
    acc_ref[...] += jnp.dot(xt, w_ref[...],
                            preferred_element_type=jnp.float32)
    if skip_kind == "proj":
        sk_ref[...] += jnp.dot(xt, ws_ref[...],
                               preferred_element_type=jnp.float32)

    @pl.when(k == nk - 1)
    def _finish():
        y = acc_ref[...] + b_ref[...]                      # (tm, Np) f32
        tm, np_pad = y.shape
        # Padded feature columns carry exact zeros (zero-padded W / bias);
        # mask them out of the variance so LayerNorm uses only n_valid features.
        col = lax.broadcasted_iota(jnp.int32, (tm, np_pad), 1)
        valid = col < n_valid
        inv_n = 1.0 / n_valid
        mean = jnp.sum(y, axis=-1, keepdims=True) * inv_n
        diff = jnp.where(valid, y - mean, 0.0)
        var = jnp.sum(diff * diff, axis=-1, keepdims=True) * inv_n
        out = diff * lax.rsqrt(var + eps) * g_ref[...] + beta_ref[...]
        if skip_kind == "proj":
            out = out + sk_ref[...] + bs_ref[...]
        elif skip_kind == "identity":
            out = out + res_ref[...].astype(jnp.float32)
        out = jnp.where(out >= 0.0, out, out * slope)      # LeakyReLU
        o_ref[...] = out.astype(o_ref.dtype)


# ------------------------------ wrapper ------------------------------------- #

def base_linear_forward(x, params, *, skip, norm="LayerNorm",
                        slope=0.01, eps=1e-5, compute_dtype=jnp.bfloat16,
                        tm_max=512, tk_max=512):
    """BaseLinear.forward. x: (..., in_features) f32 -> (..., out_features) f32."""
    if norm != "LayerNorm":
        # TODO(synk): BatchNorm1d needs batch-statistics (two-pass) support.
        raise NotImplementedError("only norm='LayerNorm' is implemented")

    orig_shape = x.shape
    k_in = orig_shape[-1]
    xf = x.reshape(-1, k_in)
    m = xf.shape[0]
    w, b = params["w"], params["b"]                        # torch layout (out, in)
    gamma, beta = params["gamma"], params["beta"]
    n_out = w.shape[0]

    skip_kind = "none"
    if skip:
        skip_kind = "proj" if ("w_skip" in params) else "identity"

    # Tile / pad sizes: lane-dense feature axes (multiples of 128), sublane-
    # aligned row tiles, K as a reduction grid axis.
    tm = min(_round_up(m, 8), tm_max)
    mp = _round_up(m, tm)
    tk = min(_round_up(k_in, 128), tk_max)
    kp = _round_up(k_in, tk)
    np_pad = _round_up(n_out, 128)

    cd = compute_dtype
    f32 = jnp.float32
    x_pad = jnp.zeros((mp, kp), cd).at[:m, :k_in].set(xf.astype(cd))
    w_pad = jnp.zeros((kp, np_pad), cd).at[:k_in, :n_out].set(w.T.astype(cd))
    b_pad = jnp.zeros((1, np_pad), f32).at[:, :n_out].set(b.astype(f32))
    g_pad = jnp.zeros((1, np_pad), f32).at[:, :n_out].set(gamma.astype(f32))
    bt_pad = jnp.zeros((1, np_pad), f32).at[:, :n_out].set(beta.astype(f32))

    x_spec = pl.BlockSpec((tm, tk), lambda i, j: (i, j))
    w_spec = pl.BlockSpec((tk, np_pad), lambda i, j: (j, 0))   # resident over rows
    row_spec = pl.BlockSpec((1, np_pad), lambda i, j: (0, 0))
    out_spec = pl.BlockSpec((tm, np_pad), lambda i, j: (i, 0))

    inputs = [x_pad, w_pad, b_pad, g_pad, bt_pad]
    in_specs = [x_spec, w_spec, row_spec, row_spec, row_spec]
    scratch = [pltpu.VMEM((tm, np_pad), jnp.float32)]

    if skip_kind == "proj":
        ws_pad = jnp.zeros((kp, np_pad), cd).at[:k_in, :n_out].set(
            params["w_skip"].T.astype(cd))
        bs_pad = jnp.zeros((1, np_pad), f32).at[:, :n_out].set(
            params["b_skip"].astype(f32))
        inputs += [ws_pad, bs_pad]
        in_specs += [w_spec, row_spec]
        scratch += [pltpu.VMEM((tm, np_pad), jnp.float32)]
    elif skip_kind == "identity":
        res_pad = jnp.zeros((mp, np_pad), cd).at[:m, :n_out].set(xf.astype(cd))
        inputs += [res_pad]
        in_specs += [pl.BlockSpec((tm, np_pad), lambda i, j: (i, 0))]

    # Explicit VMEM budget with headroom (double buffering + scratch).
    n_w = 2 if skip_kind == "proj" else 1
    bytes_in = 2 * (tm * tk * 2 + n_w * tk * np_pad * 2 + 5 * np_pad * 4
                    + (tm * np_pad * 2 if skip_kind == "identity" else 0))
    bytes_out = 2 * tm * np_pad * 4
    bytes_scr = len(scratch) * tm * np_pad * 4
    vmem_limit = int(min(48 * 1024 * 1024,
                         max(8 * 1024 * 1024,
                             2 * (bytes_in + bytes_out + bytes_scr))))

    kernel = functools.partial(_base_linear_kernel, skip_kind=skip_kind,
                               n_valid=n_out, slope=slope, eps=eps)

    out = pl.pallas_call(
        kernel,
        out_shape=jax.ShapeDtypeStruct((mp, np_pad), jnp.float32),
        grid_spec=pltpu.PrefetchScalarGridSpec(
            num_scalar_prefetch=0,
            grid=(mp // tm, kp // tk),
            in_specs=in_specs,
            out_specs=out_spec,
            scratch_shapes=scratch,
        ),
        compiler_params=pltpu.CompilerParams(
            dimension_semantics=("parallel", "arbitrary"),
            vmem_limit_bytes=vmem_limit),
    )(*inputs)

    return out[:m, :n_out].reshape(*orig_shape[:-1], n_out)


# ------------------------------ params ------------------------------------- #

def init_base_linear_params(key, in_ch, out_ch, skip):
    """Mirror nn.Linear / nn.LayerNorm default init shapes."""
    def linear_init(k, cin, cout):
        k1, k2 = jax.random.split(k)
        bound = 1.0 / np.sqrt(cin)
        w = jax.random.uniform(k1, (cout, cin), jnp.float32, -bound, bound)
        b = jax.random.uniform(k2, (cout,), jnp.float32, -bound, bound)
        return w, b

    key, sub = jax.random.split(key)
    w, b = linear_init(sub, in_ch, out_ch)
    params = dict(w=w, b=b,
                  gamma=jnp.ones((out_ch,), jnp.float32),
                  beta=jnp.zeros((out_ch,), jnp.float32))
    if skip and in_ch != out_ch:
        key, sub = jax.random.split(key)
        ws, bs = linear_init(sub, in_ch, out_ch)
        params["w_skip"] = ws
        params["b_skip"] = bs
    return params


# ----------------------------- reference ----------------------------------- #

def ref_base_linear(x, params, *, skip, slope=0.01, eps=1e-5,
                    compute_dtype=jnp.bfloat16):
    """Pure-JAX reference with the same precision policy (bf16 in, f32 acc)."""
    cd = compute_dtype
    xf = x.reshape(-1, x.shape[-1])
    y = jnp.dot(xf.astype(cd), params["w"].T.astype(cd),
                preferred_element_type=jnp.float32) + params["b"][None, :]
    mean = jnp.mean(y, axis=-1, keepdims=True)
    var = jnp.mean((y - mean) ** 2, axis=-1, keepdims=True)
    y = (y - mean) / jnp.sqrt(var + eps) * params["gamma"][None, :] \
        + params["beta"][None, :]
    if skip:
        if "w_skip" in params:
            y = y + jnp.dot(xf.astype(cd), params["w_skip"].T.astype(cd),
                            preferred_element_type=jnp.float32) \
                  + params["b_skip"][None, :]
        else:
            y = y + xf.astype(cd).astype(jnp.float32)
    y = jnp.where(y >= 0.0, y, slope * y)
    return y.reshape(*x.shape[:-1], -1)


# -------------------------------- main -------------------------------------- #

if __name__ == "__main__":
    key = jax.random.PRNGKey(0)

    configs = [
        dict(name="skip_proj",     batch=2, seq=8, cin=4,  cout=32, skip=True),
        dict(name="skip_identity", batch=2, seq=8, cin=32, cout=32, skip=True),
        dict(name="no_skip",       batch=2, seq=8, cin=4,  cout=32, skip=False),
    ]

    for cfg in configs:
        key, kx, kp = jax.random.split(key, 3)
        x = jax.random.normal(kx, (cfg["batch"], cfg["seq"], cfg["cin"]),
                              jnp.float32)
        params = init_base_linear_params(kp, cfg["cin"], cfg["cout"], cfg["skip"])

        out = base_linear_forward(x, params, skip=cfg["skip"], norm="LayerNorm")
        out = jax.block_until_ready(out)
        ref = jax.block_until_ready(ref_base_linear(x, params, skip=cfg["skip"]))

        assert out.shape == (cfg["batch"], cfg["seq"], cfg["cout"]), cfg["name"]
        np.testing.assert_allclose(np.asarray(out), np.asarray(ref),
                                   rtol=2e-3, atol=2e-3,
                                   err_msg=cfg["name"])

    print("KERNEL_OK")
</pallas_src>

<mosaic_0001>
module attributes {stable_mosaic.version = 11 : i64} {
  func.func @_base_linear_kernel(%arg0: i32, %arg1: i32, %arg2: memref<16x128xbf16, #tpu.memory_space<vmem>>, %arg3: memref<128x128xbf16, #tpu.memory_space<vmem>>, %arg4: memref<1x128xf32, #tpu.memory_space<vmem>>, %arg5: memref<1x128xf32, #tpu.memory_space<vmem>>, %arg6: memref<1x128xf32, #tpu.memory_space<vmem>>, %arg7: memref<128x128xbf16, #tpu.memory_space<vmem>>, %arg8: memref<1x128xf32, #tpu.memory_space<vmem>>, %arg9: memref<16x128xf32, #tpu.memory_space<vmem>>, %arg10: memref<16x128xf32, #tpu.memory_space<vmem>>, %arg11: memref<16x128xf32, #tpu.memory_space<vmem>>) attributes {dimension_semantics = [#tpu.dimension_semantics<parallel>, #tpu.dimension_semantics<arbitrary>], iteration_bounds = array<i64: 1, 1>, scalar_prefetch = 0 : i64, scratch_operands = 2 : i64, tpu.core_type = #tpu.core_type<tc>, window_params = [{transform_indices = @transform_0, window_bounds = array<i64: 16, 128>}, {transform_indices = @transform_1, window_bounds = array<i64: 128, 128>}, {pipeline_mode = #tpu.pipeline_mode<synchronous>, transform_indices = @transform_2, window_bounds = array<i64: 1, 128>}, {pipeline_mode = #tpu.pipeline_mode<synchronous>, transform_indices = @transform_3, window_bounds = array<i64: 1, 128>}, {pipeline_mode = #tpu.pipeline_mode<synchronous>, transform_indices = @transform_4, window_bounds = array<i64: 1, 128>}, {transform_indices = @transform_5, window_bounds = array<i64: 128, 128>}, {pipeline_mode = #tpu.pipeline_mode<synchronous>, transform_indices = @transform_6, window_bounds = array<i64: 1, 128>}, {transform_indices = @transform_7, window_bounds = array<i64: 16, 128>}]} {
    %c0_i32 = arith.constant 0 : i32
    %0 = arith.cmpi eq, %arg1, %c0_i32 : i32
    %1 = arith.extui %0 : i1 to i32
    %c0_i32_0 = arith.constant 0 : i32
    %2 = arith.cmpi ne, %1, %c0_i32_0 : i32
    scf.if %2 {
      %cst_17 = arith.constant 0.000000e+00 : f32
      %17 = vector.broadcast %cst_17 : f32 to vector<16x128xf32>
      %c0_18 = arith.constant 0 : index
      %c0_19 = arith.constant 0 : index
      %18 = vector.load %arg10[%c0_18, %c0_19] : memref<16x128xf32, #tpu.memory_space<vmem>>, vector<16x128xf32>
      tpu.vector_store %arg10[%c0_18, %c0_19], %17 {strides = array<i32>} : memref<16x128xf32, #tpu.memory_space<vmem>>, vector<16x128xf32>,
      %cst_20 = arith.constant 0.000000e+00 : f32
      %19 = vector.broadcast %cst_20 : f32 to vector<16x128xf32>
      %c0_21 = arith.constant 0 : index
      %c0_22 = arith.constant 0 : index
      %20 = vector.load %arg11[%c0_21, %c0_22] : memref<16x128xf32, #tpu.memory_space<vmem>>, vector<16x128xf32>
      tpu.vector_store %arg11[%c0_21, %c0_22], %19 {strides = array<i32>} : memref<16x128xf32, #tpu.memory_space<vmem>>, vector<16x128xf32>,
    } else {
    }
    %c0 = arith.constant 0 : index
    %c0_1 = arith.constant 0 : index
    %3 = vector.load %arg2[%c0, %c0_1] : memref<16x128xbf16, #tpu.memory_space<vmem>>, vector<16x128xbf16>
    %c0_2 = arith.constant 0 : index
    %c0_3 = arith.constant 0 : index
    %4 = vector.load %arg10[%c0_2, %c0_3] : memref<16x128xf32, #tpu.memory_space<vmem>>, vector<16x128xf32>
    %c0_4 = arith.constant 0 : index
    %c0_5 = arith.constant 0 : index
    %5 = vector.load %arg3[%c0_4, %c0_5] : memref<128x128xbf16, #tpu.memory_space<vmem>>, vector<128x128xbf16>
    %cst = arith.constant dense<0.000000e+00> : vector<16x128xf32>
    %6 = tpu.matmul %3, %5, %cst {dimension_numbers = #tpu.dot_dimension_numbers<[1], [0], [0], [1], [0, 0, 1, 1], [], []>} : vector<16x128xbf16>, vector<128x128xbf16>, vector<16x128xf32> -> vector<16x128xf32>
    %7 = arith.addf %4, %6 : vector<16x128xf32>
    %c0_6 = arith.constant 0 : index
    %c0_7 = arith.constant 0 : index
    %8 = vector.load %arg10[%c0_6, %c0_7] : memref<16x128xf32, #tpu.memory_space<vmem>>, vector<16x128xf32>
    tpu.vector_store %arg10[%c0_6, %c0_7], %7 {strides = array<i32>} : memref<16x128xf32, #tpu.memory_space<vmem>>, vector<16x128xf32>,
    %c0_8 = arith.constant 0 : index
    %c0_9 = arith.constant 0 : index
    %9 = vector.load %arg11[%c0_8, %c0_9] : memref<16x128xf32, #tpu.memory_space<vmem>>, vector<16x128xf32>
    %c0_10 = arith.constant 0 : index
    %c0_11 = arith.constant 0 : index
    %10 = vector.load %arg7[%c0_10, %c0_11] : memref<128x128xbf16, #tpu.memory_space<vmem>>, vector<128x128xbf16>
    %cst_12 = arith.constant dense<0.000000e+00> : vector<16x128xf32>
    %11 = tpu.matmul %3, %10, %cst_12 {dimension_numbers = #tpu.dot_dimension_numbers<[1], [0], [0], [1], [0, 0, 1, 1], [], []>} : vector<16x128xbf16>, vector<128x128xbf16>, vector<16x128xf32> -> vector<16x128xf32>
    %12 = arith.addf %9, %11 : vector<16x128xf32>
    %c0_13 = arith.constant 0 : index
    %c0_14 = arith.constant 0 : index
    %13 = vector.load %arg11[%c0_13, %c0_14] : memref<16x128xf32, #tpu.memory_space<vmem>>, vector<16x128xf32>
    tpu.vector_store %arg11[%c0_13, %c0_14], %12 {strides = array<i32>} : memref<16x128xf32, #tpu.memory_space<vmem>>, vector<16x128xf32>,
    %c0_i32_15 = arith.constant 0 : i32
    %14 = arith.cmpi eq, %arg1, %c0_i32_15 : i32
    %15 = arith.extui %14 : i1 to i32
    %c0_i32_16 = arith.constant 0 : i32
    %16 = arith.cmpi ne, %15, %c0_i32_16 : i32
    scf.if %16 {
      %c0_17 = arith.constant 0 : index
      %c0_18 = arith.constant 0 : index
      %17 = vector.load %arg10[%c0_17, %c0_18] : memref<16x128xf32, #tpu.memory_space<vmem>>, vector<16x128xf32>
      %c0_19 = arith.constant 0 : index
      %c0_20 = arith.constant 0 : index
      %18 = vector.load %arg4[%c0_19, %c0_20] : memref<1x128xf32, #tpu.memory_space<vmem>>, vector<1x128xf32>
      %19 = vector.broadcast %18 : vector<1x128xf32> to vector<16x128xf32>
      %20 = arith.addf %17, %19 : vector<16x128xf32>
      %21 = tpu.iota {dimensions = array<i32: 1>} : vector<16x128xi32>
      %c32_i32 = arith.constant 32 : i32
      %22 = vector.broadcast %c32_i32 : i32 to vector<16x128xi32>
      %23 = arith.cmpi slt, %21, %22 : vector<16x128xi32>
      %cst_21 = arith.constant dense<0.000000e+00> : vector<16xf32>
      %24 = vector.multi_reduction <add>, %20, %cst_21 [1] : vector<16x128xf32> to vector<16xf32>
      %25 = vector.shape_cast %24 : vector<16xf32> to vector<16x1xf32>
      %cst_22 = arith.constant 3.125000e-02 : f32
      %26 = vector.broadcast %cst_22 : f32 to vector<16x1xf32>
      %27 = arith.mulf %25, %26 : vector<16x1xf32>
      %28 = vector.broadcast %27 : vector<16x1xf32> to vector<16x128xf32>
      %29 = arith.subf %20, %28 : vector<16x128xf32>
      %cst_23 = arith.constant 0.000000e+00 : f32
      %30 = vector.broadcast %cst_23 : f32 to vector<16x128xf32>
      %31 = arith.select %23, %29, %30 : vector<16x128xi1>, vector<16x128xf32>
      %32 = arith.mulf %31, %31 : vector<16x128xf32>
      %cst_24 = arith.constant dense<0.000000e+00> : vector<16xf32>
      %33 = vector.multi_reduction <add>, %32, %cst_24 [1] : vector<16x128xf32> to vector<16xf32>
      %34 = vector.shape_cast %33 : vector<16xf32> to vector<16x1xf32>
      %cst_25 = arith.constant 3.125000e-02 : f32
      %35 = vector.broadcast %cst_25 : f32 to vector<16x1xf32>
      %36 = arith.mulf %34, %35 : vector<16x1xf32>
      %cst_26 = arith.constant 9.99999974E-6 : f32
      %37 = vector.broadcast %cst_26 : f32 to vector<16x1xf32>
      %38 = arith.addf %36, %37 : vector<16x1xf32>
      %39 = math.rsqrt %38 : vector<16x1xf32>
      %40 = vector.broadcast %39 : vector<16x1xf32> to vector<16x128xf32>
      %41 = arith.mulf %31, %40 : vector<16x128xf32>
      %c0_27 = arith.constant 0 : index
      %c0_28 = arith.constant 0 : index
      %42 = vector.load %arg5[%c0_27, %c0_28] : memref<1x128xf32, #tpu.memory_space<vmem>>, vector<1x128xf32>
      %43 = vector.broadcast %42 : vector<1x128xf32> to vector<16x128xf32>
      %44 = arith.mulf %41, %43 : vector<16x128xf32>
      %c0_29 = arith.constant 0 : index
      %c0_30 = arith.constant 0 : index
      %45 = vector.load %arg6[%c0_29, %c0_30] : memref<1x128xf32, #tpu.memory_space<vmem>>, vector<1x128xf32>
      %46 = vector.broadcast %45 : vector<1x128xf32> to vector<16x128xf32>
      %47 = arith.addf %44, %46 : vector<16x128xf32>
      %c0_31 = arith.constant 0 : index
      %c0_32 = arith.constant 0 : index
      %48 = vector.load %arg11[%c0_31, %c0_32] : memref<16x128xf32, #tpu.memory_space<vmem>>, vector<16x128xf32>
      %49 = arith.addf %47, %48 : vector<16x128xf32>
      %c0_33 = arith.constant 0 : index
      %c0_34 = arith.constant 0 : index
      %50 = vector.load %arg8[%c0_33, %c0_34] : memref<1x128xf32, #tpu.memory_space<vmem>>, vector<1x128xf32>
      %51 = vector.broadcast %50 : vector<1x128xf32> to vector<16x128xf32>
      %52 = arith.addf %49, %51 : vector<16x128xf32>
      %cst_35 = arith.constant 0.000000e+00 : f32
      %53 = vector.broadcast %cst_35 : f32 to vector<16x128xf32>
      %54 = arith.cmpf oge, %52, %53 : vector<16x128xf32>
      %cst_36 = arith.constant 0.00999999977 : f32
      %55 = vector.broadcast %cst_36 : f32 to vector<16x128xf32>
      %56 = arith.mulf %52, %55 : vector<16x128xf32>
      %57 = arith.select %54, %52, %56 : vector<16x128xi1>, vector<16x128xf32>
      %c0_37 = arith.constant 0 : index
      %c0_38 = arith.constant 0 : index
      %58 = vector.load %arg9[%c0_37, %c0_38] : memref<16x128xf32, #tpu.memory_space<vmem>>, vector<16x128xf32>
      tpu.vector_store %arg9[%c0_37, %c0_38], %57 {strides = array<i32>} : memref<16x128xf32, #tpu.memory_space<vmem>>, vector<16x128xf32>,
    } else {
    }
    return
  }
  func.func @transform_0(%arg0: i32, %arg1: i32) -> (i32, i32) {
    %c0_i32 = arith.constant 0 : i32
    return %arg0, %arg1 : i32, i32
  }
  func.func @transform_1(%arg0: i32, %arg1: i32) -> (i32, i32) {
    %c0_i32 = arith.constant 0 : i32
    %c0_i32_0 = arith.constant 0 : i32
    return %arg1, %c0_i32 : i32, i32
  }
  func.func @transform_2(%arg0: i32, %arg1: i32) -> (i32, i32) {
    %c0_i32 = arith.constant 0 : i32
    %c0_i32_0 = arith.constant 0 : i32
    %c0_i32_1 = arith.constant 0 : i32
    return %c0_i32, %c0_i32_0 : i32, i32
  }
  func.func @transform_3(%arg0: i32, %arg1: i32) -> (i32, i32) {
    %c0_i32 = arith.constant 0 : i32
    %c0_i32_0 = arith.constant 0 : i32
    %c0_i32_1 = arith.constant 0 : i32
    return %c0_i32, %c0_i32_0 : i32, i32
  }
  func.func @transform_4(%arg0: i32, %arg1: i32) -> (i32, i32) {
    %c0_i32 = arith.constant 0 : i32
    %c0_i32_0 = arith.constant 0 : i32
    %c0_i32_1 = arith.constant 0 : i32
    return %c0_i32, %c0_i32_0 : i32, i32
  }
  func.func @transform_5(%arg0: i32, %arg1: i32) -> (i32, i32) {
    %c0_i32 = arith.constant 0 : i32
    %c0_i32_0 = arith.constant 0 : i32
    return %arg1, %c0_i32 : i32, i32
  }
  func.func @transform_6(%arg0: i32, %arg1: i32) -> (i32, i32) {
    %c0_i32 = arith.constant 0 : i32
    %c0_i32_0 = arith.constant 0 : i32
    %c0_i32_1 = arith.constant 0 : i32
    return %c0_i32, %c0_i32_0 : i32, i32
  }
  func.func @transform_7(%arg0: i32, %arg1: i32) -> (i32, i32) {
    %c0_i32 = arith.constant 0 : i32
    %c0_i32_0 = arith.constant 0 : i32
    return %arg0, %c0_i32 : i32, i32
  }
}

</mosaic_0001>

<llo_original>
// kernel: tpu_custom_call.1
$region0: #{tpu_custom_call.1}
  #allocation0 [shape = 'u32[]', space=smem, size = 0x4, offset = 0x4, fixed_abs, tag = 'smem constant byte address 0x4 - core index']
  #allocation1 [shape = 'u32[144,128]{1,0:T(1,128)}', space=vmem, size = 0x12000, scoped, tag = 'internal scratch']
  #allocation2 [shape = 'f32[16,128]{1,0:T(8,128)}', space=vmem, size = 0x2000, scoped, tag = 'scratch operand']
  #allocation3 [shape = 'f32[16,128]{1,0:T(8,128)}', space=vmem, size = 0x2000, scoped, tag = 'scratch operand']
  %s0 = inlined_call_operand.hbm [shape: bf16[16,128], index: 0, kind: input, shape index: {}]
  %s1 = inlined_call_operand.hbm [shape: bf16[128,128], index: 1, kind: input, shape index: {}]
  %s2 = inlined_call_operand.vmem [shape: f32[1,128], index: 2, kind: input, shape index: {}]
  %s3 = inlined_call_operand.vmem [shape: f32[1,128], index: 3, kind: input, shape index: {}]
  %s4 = inlined_call_operand.vmem [shape: f32[1,128], index: 4, kind: input, shape index: {}]
  %s5 = inlined_call_operand.hbm [shape: bf16[128,128], index: 5, kind: input, shape index: {}]
  %s6 = inlined_call_operand.vmem [shape: f32[1,128], index: 6, kind: input, shape index: {}]
  %s7 = inlined_call_operand.hbm [shape: f32[16,128], index: 7, kind: output, shape index: {}]
  %s8 = sld [smem:[#allocation0]]
  $region58: #{tpu_custom_call.1} parent=0
    _
  %s10 = ssub.s32 1, %s8
  %s11 = scalar_select 0, %s10, %s8
  $region1: #{tpu_custom_call.1} parent=0
    #allocation4 [shape = 'u8[4096]{0}', space=vmem, size = 0x1000, scoped, tag = 'input window, operand 0, single buffered']
    #allocation5 [shape = 's32[1]{0}', space=sflag, size = 0x4, scoped, tag = 'scoped memory for tpu_custom_call.1']
    #allocation6 [shape = 's32[1]{0}', space=sflag, size = 0x4, scoped, tag = 'scoped memory for tpu_custom_call.1']
    #allocation7 [shape = 'u8[32768]{0}', space=vmem, size = 0x8000, scoped, tag = 'input window, operand 1, single buffered']
    #allocation8 [shape = 's32[1]{0}', space=sflag, size = 0x4, scoped, tag = 'scoped memory for tpu_custom_call.1']
    #allocation9 [shape = 'u8[32768]{0}', space=vmem, size = 0x8000, scoped, tag = 'input window, operand 5, single buffered']
    #allocation10 [shape = 'u8[8192]{0}', space=vmem, size = 0x2000, scoped, tag = 'output window, operand 0, single buffered']
    %12 = vsyncpa [#allocation5], 0
    %13 = vsyncpa [#allocation8], 0
    %14 = vsyncpa [#allocation6], 0
    // Predicated region
    $region2: #{tpu_custom_call.1} parent=1 // pred_check
      _
    $region3: #{tpu_custom_call.1} parent=1 // pred_check_branch
      %16 = sbr.rel (0) target = $region5
    $region4: #{tpu_custom_call.1} parent=1 // pred_region
      %s18 = ssub.s32 128, 128
      %19 = vsyncadd [#allocation5], %s18
      %s20 = sshll.u32 [#allocation4], 4
      %s21 = int_to_ptr.vmem [resolvable:$true] %s20
      %26 = dma.hbm_to_vmem [thread:$0]  %s0, 128, %s21, [#allocation5], 64, 64, 4
    $region5: #{tpu_custom_call.1} parent=1 // pred_fallthru
      _
    // Predicated region
    $region6: #{tpu_custom_call.1} parent=1 // pred_check
      _
    $region7: #{tpu_custom_call.1} parent=1 // pred_check_branch
      %28 = sbr.rel (0) target = $region9
    $region8: #{tpu_custom_call.1} parent=1 // pred_region
      %s30 = ssub.s32 1024, 1024
      %31 = vsyncadd [#allocation8], %s30
      %s32 = sshll.u32 [#allocation7], 4
      %s33 = int_to_ptr.vmem [resolvable:$true] %s32
      %38 = dma.hbm_to_vmem [thread:$0]  %s1, 1024, %s33, [#allocation8], 64, 64, 4
    $region9: #{tpu_custom_call.1} parent=1 // pred_fallthru
      _
    // Predicated region
    $region10: #{tpu_custom_call.1} parent=1 // pred_check
      _
    $region11: #{tpu_custom_call.1} parent=1 // pred_check_branch
      %40 = sbr.rel (0) target = $region13
    $region12: #{tpu_custom_call.1} parent=1 // pred_region
      _
    $region13: #{tpu_custom_call.1} parent=1 // pred_fallthru
      _
    // Predicated region
    $region14: #{tpu_custom_call.1} parent=1 // pred_check
      _
    $region15: #{tpu_custom_call.1} parent=1 // pred_check_branch
      %42 = sbr.rel (0) target = $region17
    $region16: #{tpu_custom_call.1} parent=1 // pred_region
      _
    $region17: #{tpu_custom_call.1} parent=1 // pred_fallthru
      _
    // Predicated region
    $region18: #{tpu_custom_call.1} parent=1 // pred_check
      _
    $region19: #{tpu_custom_call.1} parent=1 // pred_check_branch
      %44 = sbr.rel (0) target = $region21
    $region20: #{tpu_custom_call.1} parent=1 // pred_region
      _
    $region21: #{tpu_custom_call.1} parent=1 // pred_fallthru
      _
    // Predicated region
    $region22: #{tpu_custom_call.1} parent=1 // pred_check
      _
    $region23: #{tpu_custom_call.1} parent=1 // pred_check_branch
      %46 = sbr.rel (0) target = $region25
    $region24: #{tpu_custom_call.1} parent=1 // pred_region
      %s48 = ssub.s32 1024, 1024
      %49 = vsyncadd [#allocation8], %s48
      %s50 = sshll.u32 [#allocation9], 4
      %s51 = int_to_ptr.vmem [resolvable:$true] %s50
      %56 = dma.hbm_to_vmem [thread:$0]  %s5, 1024, %s51, [#allocation8], 64, 64, 4
    $region25: #{tpu_custom_call.1} parent=1 // pred_fallthru
      _
    // Predicated region
    $region26: #{tpu_custom_call.1} parent=1 // pred_check
      _
    $region27: #{tpu_custom_call.1} parent=1 // pred_check_branch
      %58 = sbr.rel (0) target = $region29
    $region28: #{tpu_custom_call.1} parent=1 // pred_region
      _
    $region29: #{tpu_custom_call.1} parent=1 // pred_fallthru
      _
    // Predicated region
    $region30: #{tpu_custom_call.1} parent=1 // pred_check
      _
    $region31: #{tpu_custom_call.1} parent=1 // pred_check_branch
      %60 = sbr.rel (0) target = $region33
    $region32: #{tpu_custom_call.1} parent=1 // pred_region
      %61 = dma.done [#allocation5], 128
    $region33: #{tpu_custom_call.1} parent=1 // pred_fallthru
      _
    // Predicated region
    $region34: #{tpu_custom_call.1} parent=1 // pred_check
      _
    $region35: #{tpu_custom_call.1} parent=1 // pred_check_branch
      %63 = sbr.rel (0) target = $region37
    $region36: #{tpu_custom_call.1} parent=1 // pred_region
      %64 = dma.done [#allocation8], 1024
    $region37: #{tpu_custom_call.1} parent=1 // pred_fallthru
      _
    // Predicated region
    $region38: #{tpu_custom_call.1} parent=1 // pred_check
      _
    $region39: #{tpu_custom_call.1} parent=1 // pred_check_branch
      %66 = sbr.rel (0) target = $region41
    $region40: #{tpu_custom_call.1} parent=1 // pred_region
      %67 = dma.done [#allocation8], 1024
    $region41: #{tpu_custom_call.1} parent=1 // pred_fallthru
      _
    %p69 = scmp.eq.s32.totalorder 0, 0
    // Predicated region
    $region42: #{tpu_custom_call.1} parent=1 // pred_check
      %p70 = pneg %p69
    $region43: #{tpu_custom_call.1} parent=1 // pred_check_branch
      %72 = sbr.rel (%p70) target = $region45
    $region44: #{tpu_custom_call.1} parent=1 // pred_region
      %73 = vst [vmem:[#allocation2] sm:$0xff] 0.0
      %74 = vst [vmem:[#allocation2 + $0x8] sm:$0xff] 0.0
      %75 = vst [vmem:[#allocation3] sm:$0xff] 0.0
      %76 = vst [vmem:[#allocation3 + $0x8] sm:$0xff] 0.0
    $region45: #{tpu_custom_call.1} parent=1 // pred_fallthru
      _
    %v77 = vld [vmem:[#allocation4] sm:$0xf]
    %v78 = vld [vmem:[#allocation4 + $0x4] sm:$0xf]
    %v79 = vld [vmem:[#allocation2] sm:$0xff]
    %v80 = vld [vmem:[#allocation2 + $0x8] sm:$0xff]
    %v81 = vld [vmem:[#allocation7] sm:$0xf]
    %v82 = vld [vmem:[#allocation7 + $0x4] sm:$0xf]
    %v83 = vld [vmem:[#allocation7 + $0x8] sm:$0xf]
    %v84 = vld [vmem:[#allocation7 + $0xc] sm:$0xf]
    %v85 = vld [vmem:[#allocation7 + $0x10] sm:$0xf]
    %v86 = vld [vmem:[#allocation7 + $0x14] sm:$0xf]
    %v87 = vld [vmem:[#allocation7 + $0x18] sm:$0xf]
    %v88 = vld [vmem:[#allocation7 + $0x1c] sm:$0xf]
    %v89 = vld [vmem:[#allocation7 + $0x20] sm:$0xf]
    %v90 = vld [vmem:[#allocation7 + $0x24] sm:$0xf]
    %v91 = vld [vmem:[#allocation7 + $0x28] sm:$0xf]
    %v92 = vld [vmem:[#allocation7 + $0x2c] sm:$0xf]
    %v93 = vld [vmem:[#allocation7 + $0x30] sm:$0xf]
    %v94 = vld [vmem:[#allocation7 + $0x34] sm:$0xf]
    %v95 = vld [vmem:[#allocation7 + $0x38] sm:$0xf]
    %v96 = vld [vmem:[#allocation7 + $0x3c] sm:$0xf]
    %v99 = vunpack.c.l.b16 %v77
    %v100 = vunpack.c.l.b16 %v78
    %v101 = vpack.c.b16 %v100, %v99
    %v119 = vunpack.c.l.b16 %v81
    %v120 = vunpack.c.l.b16 %v82
    %v121 = vunpack.c.l.b16 %v83
    %v122 = vunpack.c.l.b16 %v84
    %v123 = vunpack.c.l.b16 %v85
    %v124 = vunpack.c.l.b16 %v86
    %v125 = vunpack.c.l.b16 %v87
    %v126 = vunpack.c.l.b16 %v88
    %v127 = vunpack.c.l.b16 %v89
    %v128 = vunpack.c.l.b16 %v90
    %v129 = vunpack.c.l.b16 %v91
    %v130 = vunpack.c.l.b16 %v92
    %v131 = vunpack.c.l.b16 %v93
    %v132 = vunpack.c.l.b16 %v94
    %v133 = vunpack.c.l.b16 %v95
    %v134 = vunpack.c.l.b16 %v96
    %v135 = vpack.c.b16 %v120, %v119
    %v136 = vpack.c.b16 %v122, %v121
    %v137 = vpack.c.b16 %v124, %v123
    %v138 = vpack.c.b16 %v126, %v125
    %v139 = vpack.c.b16 %v128, %v127
    %v140 = vpack.c.b16 %v130, %v129
    %v141 = vpack.c.b16 %v132, %v131
    %v142 = vpack.c.b16 %v134, %v133
    %151 = vmatprep.subr.bf16.mxu0 0
    %152 = vmatpush1.bf16.msra.mxu0 %v135
    %153 = vmatprep.subr.bf16.mxu0 0
    %154 = vmatpush1.bf16.msra.mxu0 %v136
    %155 = vmatprep.subr.bf16.mxu0 0
    %156 = vmatpush1.bf16.msra.mxu0 %v137
    %157 = vmatprep.subr.bf16.mxu0 0
    %158 = vmatpush1.bf16.msra.mxu0 %v138
    %159 = vmatprep.subr.bf16.mxu0 0
    %160 = vmatpush1.bf16.msra.mxu0 %v139
    %161 = vmatprep.subr.bf16.mxu0 0
    %162 = vmatpush1.bf16.msra.mxu0 %v140
    %163 = vmatprep.subr.bf16.mxu0 0
    %164 = vmatpush1.bf16.msra.mxu0 %v141
    %165 = vmatprep.subr.bf16.mxu0 0
    %166 = vmatpush1.bf16.msra.mxu0 %v142
    %167 = vmatprep.subr.bf16.mxu0 0
    %168 = vmatpush1.bf16.msra.mxu0 0
    %169 = vmatprep.subr.bf16.mxu0 0
    %170 = vmatpush1.bf16.msra.mxu0 0
    %171 = vmatprep.subr.bf16.mxu0 0
    %172 = vmatpush1.bf16.msra.mxu0 0
    %173 = vmatprep.subr.bf16.mxu0 0
    %174 = vmatpush1.bf16.msra.mxu0 0
    %175 = vmatprep.subr.bf16.mxu0 0
    %176 = vmatpush1.bf16.msra.mxu0 0
    %177 = vmatprep.subr.bf16.mxu0 0
    %178 = vmatpush1.bf16.msra.mxu0 0
    %179 = vmatprep.subr.bf16.mxu0 0
    %180 = vmatpush1.bf16.msra.mxu0 0
    %181 = vmatprep.subr.bf16.mxu0 0
    %182 = vmatpush1.bf16.msra.mxu0 0
    %183 = vmatprep.mubr.bf16.mxu0 0
    %184 = vmatmul.mubr.bf16.gmra.mrb[0].mxu0 %v101
    %v185 = vpop.f32.mrb[0].mxu0
    %v186 = vadd.f32 0.0, %v185
    %v187 = vpop.f32.mrb[0].mxu0
    %v188 = vpop.f32.mrb[0].mxu0
    %v189 = vadd.f32 0.0, %v188
    %v190 = vpop.f32.mrb[0].mxu0
    %191 = vdwg.mxu0
    %v192 = vadd.f32 %v79, %v186
    %v193 = vadd.f32 %v80, %v189
    %194 = vst [vmem:[#allocation2] sm:$0xff] %v192
    %195 = vst [vmem:[#allocation2 + $0x8] sm:$0xff] %v193
    %v196 = vld [vmem:[#allocation3] sm:$0xff]
    %v197 = vld [vmem:[#allocation3 + $0x8] sm:$0xff]
    %v198 = vld [vmem:[#allocation9] sm:$0xf]
    %v199 = vld [vmem:[#allocation9 + $0x4] sm:$0xf]
    %v200 = vld [vmem:[#allocation9 + $0x8] sm:$0xf]
    %v201 = vld [vmem:[#allocation9 + $0xc] sm:$0xf]
    %v202 = vld [vmem:[#allocation9 + $0x10] sm:$0xf]
    %v203 = vld [vmem:[#allocation9 + $0x14] sm:$0xf]
    %v204 = vld [vmem:[#allocation9 + $0x18] sm:$0xf]
    %v205 = vld [vmem:[#allocation9 + $0x1c] sm:$0xf]
    %v206 = vld [vmem:[#allocation9 + $0x20] sm:$0xf]
    %v207 = vld [vmem:[#allocation9 + $0x24] sm:$0xf]
    %v208 = vld [vmem:[#allocation9 + $0x28] sm:$0xf]
    %v209 = vld [vmem:[#allocation9 + $0x2c] sm:$0xf]
    %v210 = vld [vmem:[#allocation9 + $0x30] sm:$0xf]
    %v211 = vld [vmem:[#allocation9 + $0x34] sm:$0xf]
    %v212 = vld [vmem:[#allocation9 + $0x38] sm:$0xf]
    %v213 = vld [vmem:[#allocation9 + $0x3c] sm:$0xf]
    %v230 = vunpack.c.l.b16 %v198
    %v231 = vunpack.c.l.b16 %v199
    %v232 = vunpack.c.l.b16 %v200
    %v233 = vunpack.c.l.b16 %v201
    %v234 = vunpack.c.l.b16 %v202
    %v235 = vunpack.c.l.b16 %v203
    %v236 = vunpack.c.l.b16 %v204
    %v237 = vunpack.c.l.b16 %v205
    %v238 = vunpack.c.l.b16 %v206
    %v239 = vunpack.c.l.b16 %v207
    %v240 = vunpack.c.l.b16 %v208
    %v241 = vunpack.c.l.b16 %v209
    %v242 = vunpack.c.l.b16 %v210
    %v243 = vunpack.c.l.b16 %v211
    %v244 = vunpack.c.l.b16 %v212
    %v245 = vunpack.c.l.b16 %v213
    %v246 = vpack.c.b16 %v231, %v230
    %v247 = vpack.c.b16 %v233, %v232
    %v248 = vpack.c.b16 %v235, %v234
    %v249 = vpack.c.b16 %v237, %v236
    %v250 = vpack.c.b16 %v239, %v238
    %v251 = vpack.c.b16 %v241, %v240
    %v252 = vpack.c.b16 %v243, %v242
    %v253 = vpack.c.b16 %v245, %v244
    %262 = vmatprep.subr.bf16.mxu0 0
    %263 = vmatpush1.bf16.msra.mxu0 %v246
    %264 = vmatprep.subr.bf16.mxu0 0
    %265 = vmatpush1.bf16.msra.mxu0 %v247
    %266 = vmatprep.subr.bf16.mxu0 0
    %267 = vmatpush1.bf16.msra.mxu0 %v248
    %268 = vmatprep.subr.bf16.mxu0 0
    %269 = vmatpush1.bf16.msra.mxu0 %v249
    %270 = vmatprep.subr.bf16.mxu0 0
    %271 = vmatpush1.bf16.msra.mxu0 %v250
    %272 = vmatprep.subr.bf16.mxu0 0
    %273 = vmatpush1.bf16.msra.mxu0 %v251
    %274 = vmatprep.subr.bf16.mxu0 0
    %275 = vmatpush1.bf16.msra.mxu0 %v252
    %276 = vmatprep.subr.bf16.mxu0 0
    %277 = vmatpush1.bf16.msra.mxu0 %v253
    %278 = vmatprep.subr.bf16.mxu0 0
    %279 = vmatpush1.bf16.msra.mxu0 0
    %280 = vmatprep.subr.bf16.mxu0 0
    %281 = vmatpush1.bf16.msra.mxu0 0
    %282 = vmatprep.subr.bf16.mxu0 0
    %283 = vmatpush1.bf16.msra.mxu0 0
    %284 = vmatprep.subr.bf16.mxu0 0
    %285 = vmatpush1.bf16.msra.mxu0 0
    %286 = vmatprep.subr.bf16.mxu0 0
    %287 = vmatpush1.bf16.msra.mxu0 0
    %288 = vmatprep.subr.bf16.mxu0 0
    %289 = vmatpush1.bf16.msra.mxu0 0
    %290 = vmatprep.subr.bf16.mxu0 0
    %291 = vmatpush1.bf16.msra.mxu0 0
    %292 = vmatprep.subr.bf16.mxu0 0
    %293 = vmatpush1.bf16.msra.mxu0 0
    %294 = vmatprep.mubr.bf16.mxu0 0
    %295 = vmatmul.mubr.bf16.gmra.mrb[0].mxu0 %v101
    %v296 = vpop.f32.mrb[0].mxu0
    %v297 = vadd.f32 0.0, %v296
    %v298 = vpop.f32.mrb[0].mxu0
    %v299 = vpop.f32.mrb[0].mxu0
    %v300 = vadd.f32 0.0, %v299
    %v301 = vpop.f32.mrb[0].mxu0
    %302 = vdwg.mxu0
    %v303 = vadd.f32 %v196, %v297
    %v304 = vadd.f32 %v197, %v300
    %305 = vst [vmem:[#allocation3] sm:$0xff] %v303
    %306 = vst [vmem:[#allocation3 + $0x8] sm:$0xff] %v304
    // Predicated region
    $region46: #{tpu_custom_call.1} parent=1 // pred_check
      %p307 = pneg %p69
    $region47: #{tpu_custom_call.1} parent=1 // pred_check_branch
      %309 = sbr.rel (%p307) target = $region49
    $region48: #{tpu_custom_call.1} parent=1 // pred_region
      %v310 = vld [vmem:[#allocation2] sm:$0xff]
      %v311 = vld [vmem:[#allocation2 + $0x8] sm:$0xff]
      %v312 = vld [vmem:[%s2] sm:$0x1]
      %v314 = vlaneseq
      %v315 = vshrl.u32 %v314, 7
      %v316 = vsub.s32 0, %v315
      %v317 = vrot.slane %v312, %v316
      %v319 = vadd.f32 %v310, %v317
      %v320 = vadd.f32 %v311, %v317
      %v321 = vlaneseq
      %v322 = vand.u32 %v321, 127
      %vm323 = vcmp.lt.s32.totalorder %v322, 32
      %324 = vadd.xlane.f32.xlu0 %v319
      %v325 = vpop.xlane.xlu0 %324
      %326 = vadd.xlane.f32.xlu0 %v320
      %v327 = vpop.xlane.xlu0 %326
      %v328 = vmul.f32 %v325, 0.03125
      %v329 = vmul.f32 %v327, 0.03125
      %v330 = vsub.f32 %v319, %v328
      %v331 = vsub.f32 %v320, %v329
      %v332 = vsel %vm323, %v330, 0.0
      %v333 = vsel %vm323, %v331, 0.0
      %v334 = vmul.f32 %v332, %v332
      %v335 = vmul.f32 %v333, %v333
      %336 = vadd.xlane.f32.xlu0 %v334
      %v337 = vpop.xlane.xlu0 %336
      %338 = vadd.xlane.f32.xlu0 %v335
      %v339 = vpop.xlane.xlu0 %338
      %v340 = vmul.f32 %v337, 0.03125
      %v341 = vmul.f32 %v339, 0.03125
      %v342 = vadd.f32 %v340, 1e-05
      %v343 = vadd.f32 %v341, 1e-05
      %v344 = vrsqrt.pop %v342
      %v345 = vrsqrt.pop %v343
      %v346 = vmul.f32 %v332, %v344
      %v347 = vmul.f32 %v333, %v345
      %v348 = vld [vmem:[%s3] sm:$0x1]
      %v350 = vlaneseq
      %v351 = vshrl.u32 %v350, 7
      %v352 = vsub.s32 0, %v351
      %v353 = vrot.slane %v348, %v352
      %v355 = vmul.f32 %v346, %v353
      %v356 = vmul.f32 %v347, %v353
      %v357 = vld [vmem:[%s4] sm:$0x1]
      %v359 = vlaneseq
      %v360 = vshrl.u32 %v359, 7
      %v361 = vsub.s32 0, %v360
      %v362 = vrot.slane %v357, %v361
      %v364 = vadd.f32 %v355, %v362
      %v365 = vadd.f32 %v356, %v362
      %v366 = vld [vmem:[#allocation3] sm:$0xff]
      %v367 = vld [vmem:[#allocation3 + $0x8] sm:$0xff]
      %v368 = vadd.f32 %v364, %v366
      %v369 = vadd.f32 %v365, %v367
      %v370 = vld [vmem:[%s6] sm:$0x1]
      %v372 = vlaneseq
      %v373 = vshrl.u32 %v372, 7
      %v374 = vsub.s32 0, %v373
      %v375 = vrot.slane %v370, %v374
      %v377 = vadd.f32 %v368, %v375
      %v378 = vadd.f32 %v369, %v375
      %vm379 = vcmp.ge.f32.partialorder %v377, 0.0
      %vm380 = vcmp.ge.f32.partialorder %v378, 0.0
      %v381 = vmul.f32 %v377, 0.01
      %v382 = vmul.f32 %v378, 0.01
      %v383 = vsel %vm379, %v377, %v381
      %v384 = vsel %vm380, %v378, %v382
      %385 = vst [vmem:[#allocation10] sm:$0xff] %v383
      %386 = vst [vmem:[#allocation10 + $0x8] sm:$0xff] %v384
    $region49: #{tpu_custom_call.1} parent=1 // pred_fallthru
      _
    // Predicated region
    $region50: #{tpu_custom_call.1} parent=1 // pred_check
      _
    $region51: #{tpu_custom_call.1} parent=1 // pred_check_branch
      %388 = sbr.rel (0) target = $region53
    $region52: #{tpu_custom_call.1} parent=1 // pred_region
      %s390 = ssub.s32 256, 256
      %391 = vsyncadd [#allocation6], %s390
      %s392 = sshll.u32 [#allocation10], 4
      %s393 = int_to_ptr.vmem [resolvable:$true] %s392
      %398 = dma.vmem_to_hbm [thread:$0]  %s393, 256, %s7, [#allocation6], 128, 128, 8
    $region53: #{tpu_custom_call.1} parent=1 // pred_fallthru
      _
    // Predicated region
    $region54: #{tpu_custom_call.1} parent=1 // pred_check
      _
    $region55: #{tpu_custom_call.1} parent=1 // pred_check_branch
      %400 = sbr.rel (0) target = $region57
    $region56: #{tpu_custom_call.1} parent=1 // pred_region
      %401 = dma.done [#allocation6], 256
    $region57: #{tpu_custom_call.1} parent=1 // pred_fallthru
      _
    %402 = vsyncpa [#allocation5], 1
    %403 = vsyncpa [#allocation8], 1
    %404 = vsyncpa [#allocation6], 1

</llo_original>
